<compile_context>
chip_gen: v7x
topology: tpu7x:2x2x1
jax: 0.10.0
libtpu: 0.0.40
codegen_flags: <defaults>
</compile_context>

<pallas_src>
import functools

import jax
import jax.numpy as jnp
from jax.experimental import pallas as pl
from jax.experimental.pallas import tpu as pltpu


def _cloud_proj_kernel(rels_ref, embeds_ref, mats_ref, out_ref, *, block_b):
    """One grid step: `block_b` batch rows x one N-tile.

    rels_ref:   (Bp,) int32 in SMEM (scalar-prefetched relation ids)
    embeds_ref: (block_b, block_n, Dp) VMEM tile of the padded embeddings
    mats_ref:   (nrels, Dp, Dp) — whole relation table, VMEM-resident
                (constant block index -> fetched from HBM only once).
    out_ref:    (block_b, block_n, Dp)
    """
    b0 = pl.program_id(0) * block_b
    for i in range(block_b):                     # static unroll; block_b is small
        r = rels_ref[b0 + i]                     # relation id for this batch row
        m = mats_ref[r]                          # (Dp, Dp) in-VMEM gather
        e = embeds_ref[i]                        # (block_n, Dp)
        y = jnp.dot(e, m, preferred_element_type=jnp.float32)   # MXU
        # L2-normalize last dim: rsqrt * mul (EUP) instead of sqrt + divide (VPU).
        inv = jax.lax.rsqrt(jnp.sum(y * y, axis=-1, keepdims=True))
        out_ref[i] = (y * inv).astype(out_ref.dtype)


def cloud_projection(embeds, rels, mats):
    """embeds: (B, N, D) f32, rels: (B,) int32, mats: (nrels, D, D) f32."""
    B, N, D = embeds.shape
    nrels = mats.shape[0]
    assert mats.shape == (nrels, D, D)
    assert rels.shape == (B,)

    # ---- lane-dense padding: D -> multiple of 128 (exact for matmul & norm) ----
    Dp = max(128, pl.cdiv(D, 128) * 128)
    if Dp != D:
        embeds_p = jnp.pad(embeds, ((0, 0), (0, 0), (0, Dp - D)))
        mats_p = jnp.pad(mats, ((0, 0), (0, Dp - D), (0, Dp - D)))
    else:
        embeds_p, mats_p = embeds, mats

    # ---- block sizes: big enough to amortize per-step overhead, small enough to
    #      keep double-buffering alive within VMEM (incl. v7x's 64 MiB). ----
    block_n = min(N, 256)                        # multiple of 8, or the full N
    Np = pl.cdiv(N, block_n) * block_n
    row_bytes = block_n * Dp * 4
    block_b = int(max(1, min(B, 8, (2 << 20) // row_bytes)))
    Bp = pl.cdiv(B, block_b) * block_b

    if (Bp, Np) != (B, N):
        embeds_p = jnp.pad(embeds_p, ((0, Bp - B), (0, Np - N), (0, 0)))
    rels_p = rels.astype(jnp.int32)
    if Bp != B:
        rels_p = jnp.pad(rels_p, ((0, Bp - B),))     # pad with 0 (a valid index)

    mats_bytes = nrels * Dp * Dp * 4
    blk_bytes = block_b * block_n * Dp * 4
    # TODO(synk): for very large nrels*D^2 (table no longer VMEM-resident), fall
    # back to a rels-indexed mats BlockSpec gather / MoE-style relation grouping.
    assert 2 * mats_bytes + 4 * blk_bytes < (48 << 20), (
        "relation table too large to keep VMEM-resident")
    vmem_limit = int(min(max(2 * mats_bytes + 4 * blk_bytes + (2 << 20), 32 << 20),
                         64 << 20))

    grid = (Bp // block_b, Np // block_n)

    grid_spec = pltpu.PrefetchScalarGridSpec(
        num_scalar_prefetch=1,                       # rels -> SMEM
        grid=grid,
        in_specs=[
            # embeds: one (block_b, block_n, Dp) tile per grid step
            pl.BlockSpec((block_b, block_n, Dp),
                         lambda bi, ni, rels_ref: (bi, ni, 0)),
            # mats: constant block index -> full table resident, DMA'd once
            pl.BlockSpec((nrels, Dp, Dp),
                         lambda bi, ni, rels_ref: (0, 0, 0)),
        ],
        out_specs=pl.BlockSpec((block_b, block_n, Dp),
                               lambda bi, ni, rels_ref: (bi, ni, 0)),
    )

    out_p = pl.pallas_call(
        functools.partial(_cloud_proj_kernel, block_b=block_b),
        out_shape=jax.ShapeDtypeStruct((Bp, Np, Dp), embeds.dtype),
        grid_spec=grid_spec,
        compiler_params=pltpu.CompilerParams(
            dimension_semantics=("parallel", "parallel"),
            vmem_limit_bytes=vmem_limit,
        ),
    )(rels_p, embeds_p, mats_p)

    return out_p[:B, :N, :D]


def _xavier_uniform(key, shape):
    # torch.nn.init.xavier_uniform_ on (nrels, D, D): fan_in = fan_out = D
    fan_in, fan_out = shape[-1], shape[-2]
    bound = (6.0 / (fan_in + fan_out)) ** 0.5
    return jax.random.uniform(key, shape, jnp.float32, -bound, bound)


if __name__ == "__main__":
    # Small shapes consistent with the module.
    B, N, D, NRELS = 2, 8, 32, 4

    key = jax.random.PRNGKey(0)
    k_mats, k_emb, k_rel = jax.random.split(key, 3)

    mats = _xavier_uniform(k_mats, (NRELS, D, D))
    embeds = jax.random.normal(k_emb, (B, N, D), jnp.float32)
    rels = jax.random.randint(k_rel, (B,), 0, NRELS, jnp.int32)

    out = jax.block_until_ready(cloud_projection(embeds, rels, mats))

    # Reference check in plain JAX (same math as the PyTorch forward).
    rel_mats = mats[rels]                                        # (B, D, D)
    ref = jnp.einsum("bnd,bde->bne", embeds, rel_mats)
    ref = ref / jnp.linalg.norm(ref, axis=2, keepdims=True)
    assert out.shape == (B, N, D)
    assert jnp.allclose(out, ref, atol=1e-5, rtol=1e-5)

    print("KERNEL_OK")
</pallas_src>

<mosaic_0001>
module attributes {stable_mosaic.version = 11 : i64} {
  func.func @_cloud_proj_kernel(%arg0: i32, %arg1: i32, %arg2: memref<2xi32, #tpu.memory_space<smem>>, %arg3: memref<2x8x128xf32, #tpu.memory_space<vmem>>, %arg4: memref<4x128x128xf32, #tpu.memory_space<vmem>>, %arg5: memref<2x8x128xf32, #tpu.memory_space<vmem>>) attributes {dimension_semantics = [#tpu.dimension_semantics<parallel>, #tpu.dimension_semantics<parallel>], iteration_bounds = array<i64: 1, 1>, scalar_prefetch = 1 : i64, scratch_operands = 0 : i64, tpu.core_type = #tpu.core_type<tc>, window_params = [{transform_indices = @transform_0, window_bounds = array<i64: 2, 8, 128>}, {pipeline_mode = #tpu.pipeline_mode<synchronous>, transform_indices = @transform_1, window_bounds = array<i64: 4, 128, 128>}, {transform_indices = @transform_2, window_bounds = array<i64: 2, 8, 128>}]} {
    %c2_i32 = arith.constant 2 : i32
    %0 = arith.muli %arg0, %c2_i32 : i32
    %c0_i32 = arith.constant 0 : i32
    %1 = arith.addi %0, %c0_i32 : i32
    %2 = arith.index_cast %1 : i32 to index
    %3 = memref.load %arg2[%2] : memref<2xi32, #tpu.memory_space<smem>>
    %4 = arith.index_cast %3 : i32 to index
    %c0 = arith.constant 0 : index
    %c0_0 = arith.constant 0 : index
    %5 = vector.load %arg4[%4, %c0, %c0_0] : memref<4x128x128xf32, #tpu.memory_space<vmem>>, vector<1x128x128xf32>
    %6 = vector.shape_cast %5 : vector<1x128x128xf32> to vector<128x128xf32>
    %c0_1 = arith.constant 0 : index
    %c0_2 = arith.constant 0 : index
    %c0_3 = arith.constant 0 : index
    %7 = vector.load %arg3[%c0_1, %c0_2, %c0_3] : memref<2x8x128xf32, #tpu.memory_space<vmem>>, vector<1x8x128xf32>
    %8 = vector.shape_cast %7 : vector<1x8x128xf32> to vector<8x128xf32>
    %cst = arith.constant dense<0.000000e+00> : vector<8x128xf32>
    %9 = tpu.matmul %8, %6, %cst {dimension_numbers = #tpu.dot_dimension_numbers<[1], [0], [0], [1], [0, 0, 1, 1], [], []>} : vector<8x128xf32>, vector<128x128xf32>, vector<8x128xf32> -> vector<8x128xf32>
    %10 = arith.mulf %9, %9 : vector<8x128xf32>
    %cst_4 = arith.constant dense<0.000000e+00> : vector<8xf32>
    %11 = vector.multi_reduction <add>, %10, %cst_4 [1] : vector<8x128xf32> to vector<8xf32>
    %12 = vector.shape_cast %11 : vector<8xf32> to vector<8x1xf32>
    %13 = math.rsqrt %12 : vector<8x1xf32>
    %14 = vector.broadcast %13 : vector<8x1xf32> to vector<8x128xf32>
    %15 = arith.mulf %9, %14 : vector<8x128xf32>
    %c0_5 = arith.constant 0 : index
    %c0_6 = arith.constant 0 : index
    %c0_7 = arith.constant 0 : index
    %16 = vector.load %arg5[%c0_5, %c0_6, %c0_7] : memref<2x8x128xf32, #tpu.memory_space<vmem>>, vector<1x8x128xf32>
    %17 = vector.shape_cast %16 : vector<1x8x128xf32> to vector<8x128xf32>
    %18 = vector.shape_cast %15 : vector<8x128xf32> to vector<1x8x128xf32>
    tpu.vector_store %arg5[%c0_5, %c0_6, %c0_7], %18 {strides = array<i32>} : memref<2x8x128xf32, #tpu.memory_space<vmem>>, vector<1x8x128xf32>,
    %c1_i32 = arith.constant 1 : i32
    %19 = arith.addi %0, %c1_i32 : i32
    %20 = arith.index_cast %19 : i32 to index
    %21 = memref.load %arg2[%20] : memref<2xi32, #tpu.memory_space<smem>>
    %22 = arith.index_cast %21 : i32 to index
    %c0_8 = arith.constant 0 : index
    %c0_9 = arith.constant 0 : index
    %23 = vector.load %arg4[%22, %c0_8, %c0_9] : memref<4x128x128xf32, #tpu.memory_space<vmem>>, vector<1x128x128xf32>
    %24 = vector.shape_cast %23 : vector<1x128x128xf32> to vector<128x128xf32>
    %c1 = arith.constant 1 : index
    %c0_10 = arith.constant 0 : index
    %c0_11 = arith.constant 0 : index
    %25 = vector.load %arg3[%c1, %c0_10, %c0_11] : memref<2x8x128xf32, #tpu.memory_space<vmem>>, vector<1x8x128xf32>
    %26 = vector.shape_cast %25 : vector<1x8x128xf32> to vector<8x128xf32>
    %cst_12 = arith.constant dense<0.000000e+00> : vector<8x128xf32>
    %27 = tpu.matmul %26, %24, %cst_12 {dimension_numbers = #tpu.dot_dimension_numbers<[1], [0], [0], [1], [0, 0, 1, 1], [], []>} : vector<8x128xf32>, vector<128x128xf32>, vector<8x128xf32> -> vector<8x128xf32>
    %28 = arith.mulf %27, %27 : vector<8x128xf32>
    %cst_13 = arith.constant dense<0.000000e+00> : vector<8xf32>
    %29 = vector.multi_reduction <add>, %28, %cst_13 [1] : vector<8x128xf32> to vector<8xf32>
    %30 = vector.shape_cast %29 : vector<8xf32> to vector<8x1xf32>
    %31 = math.rsqrt %30 : vector<8x1xf32>
    %32 = vector.broadcast %31 : vector<8x1xf32> to vector<8x128xf32>
    %33 = arith.mulf %27, %32 : vector<8x128xf32>
    %c1_14 = arith.constant 1 : index
    %c0_15 = arith.constant 0 : index
    %c0_16 = arith.constant 0 : index
    %34 = vector.load %arg5[%c1_14, %c0_15, %c0_16] : memref<2x8x128xf32, #tpu.memory_space<vmem>>, vector<1x8x128xf32>
    %35 = vector.shape_cast %34 : vector<1x8x128xf32> to vector<8x128xf32>
    %36 = vector.shape_cast %33 : vector<8x128xf32> to vector<1x8x128xf32>
    tpu.vector_store %arg5[%c1_14, %c0_15, %c0_16], %36 {strides = array<i32>} : memref<2x8x128xf32, #tpu.memory_space<vmem>>, vector<1x8x128xf32>,
    return
  }
  func.func @transform_0(%arg0: i32, %arg1: i32, %arg2: memref<2xi32, #tpu.memory_space<smem>>) -> (i32, i32, i32) {
    %c0_i32 = arith.constant 0 : i32
    %c0_i32_0 = arith.constant 0 : i32
    return %arg0, %arg1, %c0_i32 : i32, i32, i32
  }
  func.func @transform_1(%arg0: i32, %arg1: i32, %arg2: memref<2xi32, #tpu.memory_space<smem>>) -> (i32, i32, i32) {
    %c0_i32 = arith.constant 0 : i32
    %c0_i32_0 = arith.constant 0 : i32
    %c0_i32_1 = arith.constant 0 : i32
    %c0_i32_2 = arith.constant 0 : i32
    return %c0_i32, %c0_i32_0, %c0_i32_1 : i32, i32, i32
  }
  func.func @transform_2(%arg0: i32, %arg1: i32, %arg2: memref<2xi32, #tpu.memory_space<smem>>) -> (i32, i32, i32) {
    %c0_i32 = arith.constant 0 : i32
    %c0_i32_0 = arith.constant 0 : i32
    return %arg0, %arg1, %c0_i32 : i32, i32, i32
  }
}

</mosaic_0001>

<llo_original>
// kernel: tpu_custom_call.1
$region0: #{tpu_custom_call.1}
  #allocation0 [shape = 'u32[]', space=smem, size = 0x4, offset = 0x4, fixed_abs, tag = 'smem constant byte address 0x4 - core index']
  #allocation1 [shape = 'u32[144,128]{1,0:T(1,128)}', space=vmem, size = 0x12000, scoped, tag = 'internal scratch']
  #allocation2 [shape = 's32[1]{0}', space=sflag, size = 0x4, scoped, tag = 'scoped memory for tpu_custom_call.1']
  #allocation3 [shape = 'u8[512]{0}', space=smem, size = 0x200, scoped, tag = 'prefetched SMEM operand 0']
  %s0 = inlined_call_operand.hbm [shape: s32[2], index: 0, kind: input, shape index: {}]
  %s1 = inlined_call_operand.hbm [shape: f32[2,8,128], index: 1, kind: input, shape index: {}]
  %s2 = inlined_call_operand.hbm [shape: f32[4,128,128], index: 2, kind: input, shape index: {}]
  %s3 = inlined_call_operand.hbm [shape: f32[2,8,128], index: 3, kind: output, shape index: {}]
  %s4 = sld [smem:[#allocation0]]
  $region26: #{tpu_custom_call.1} parent=0
    _
  %s6 = ssub.s32 1, %s4
  %s7 = scalar_select 0, %s6, %s4
  %9 = dma.hbm_to_smem %s0, 16, [#allocation3], [#allocation2]
  %10 = dma.done [#allocation2], 16
  %11 = sfence
  $region1: #{tpu_custom_call.1} parent=0
    #allocation4 [shape = 'u8[8192]{0}', space=vmem, size = 0x2000, scoped, tag = 'input window, operand 1, single buffered']
    #allocation5 [shape = 's32[1]{0}', space=sflag, size = 0x4, scoped, tag = 'scoped memory for tpu_custom_call.1']
    #allocation6 [shape = 's32[1]{0}', space=sflag, size = 0x4, scoped, tag = 'scoped memory for tpu_custom_call.1']
    #allocation7 [shape = 'u8[262144]{0}', space=vmem, size = 0x40000, scoped, tag = 'input window, operand 2, single buffered']
    #allocation8 [shape = 's32[1]{0}', space=sflag, size = 0x4, scoped, tag = 'scoped memory for tpu_custom_call.1']
    #allocation9 [shape = 'u8[8192]{0}', space=vmem, size = 0x2000, scoped, tag = 'output window, operand 0, single buffered']
    %12 = vsyncpa [#allocation5], 0
    %13 = vsyncpa [#allocation8], 0
    %14 = vsyncpa [#allocation6], 0
    // Predicated region
    $region2: #{tpu_custom_call.1} parent=1 // pred_check
      _
    $region3: #{tpu_custom_call.1} parent=1 // pred_check_branch
      %16 = sbr.rel (0) target = $region5
    $region4: #{tpu_custom_call.1} parent=1 // pred_region
      %s18 = ssub.s32 256, 256
      %19 = vsyncadd [#allocation5], %s18
      %s20 = sshll.u32 [#allocation4], 4
      %s21 = int_to_ptr.vmem [resolvable:$true] %s20
      %26 = dma.hbm_to_vmem [thread:$0]  %s1, 256, %s21, [#allocation5], 128, 128, 8
    $region5: #{tpu_custom_call.1} parent=1 // pred_fallthru
      _
    // Predicated region
    $region6: #{tpu_custom_call.1} parent=1 // pred_check
      _
    $region7: #{tpu_custom_call.1} parent=1 // pred_check_branch
      %28 = sbr.rel (0) target = $region9
    $region8: #{tpu_custom_call.1} parent=1 // pred_region
      %s30 = ssub.s32 8192, 8192
      %31 = vsyncadd [#allocation8], %s30
      %s32 = sshll.u32 [#allocation7], 4
      %s33 = int_to_ptr.vmem [resolvable:$true] %s32
      %38 = dma.hbm_to_vmem [thread:$0]  %s2, 8192, %s33, [#allocation8], 128, 128, 8
    $region9: #{tpu_custom_call.1} parent=1 // pred_fallthru
      _
    // Predicated region
    $region10: #{tpu_custom_call.1} parent=1 // pred_check
      _
    $region11: #{tpu_custom_call.1} parent=1 // pred_check_branch
      %40 = sbr.rel (0) target = $region13
    $region12: #{tpu_custom_call.1} parent=1 // pred_region
      %41 = dma.done [#allocation5], 256
    $region13: #{tpu_custom_call.1} parent=1 // pred_fallthru
      _
    // Predicated region
    $region14: #{tpu_custom_call.1} parent=1 // pred_check
      _
    $region15: #{tpu_custom_call.1} parent=1 // pred_check_branch
      %43 = sbr.rel (0) target = $region17
    $region16: #{tpu_custom_call.1} parent=1 // pred_region
      %44 = dma.done [#allocation8], 8192
    $region17: #{tpu_custom_call.1} parent=1 // pred_fallthru
      _
    %s45 = smul.u32 0, 2
    %s46 = sld [smem:[#allocation3 + %s45]]
    %s47 = smul.u32 %s46, 128
    %s48 = scalar_lea.vmem [#allocation7], %s47
    %v49 = vld [vmem:[%s48] sm:$0xff]
    %v50 = vld [vmem:[%s48 + $0x8] sm:$0xff]
    %v51 = vld [vmem:[%s48 + $0x10] sm:$0xff]
    %v52 = vld [vmem:[%s48 + $0x18] sm:$0xff]
    %v53 = vld [vmem:[%s48 + $0x20] sm:$0xff]
    %v54 = vld [vmem:[%s48 + $0x28] sm:$0xff]
    %v55 = vld [vmem:[%s48 + $0x30] sm:$0xff]
    %v56 = vld [vmem:[%s48 + $0x38] sm:$0xff]
    %v57 = vld [vmem:[%s48 + $0x40] sm:$0xff]
    %v58 = vld [vmem:[%s48 + $0x48] sm:$0xff]
    %v59 = vld [vmem:[%s48 + $0x50] sm:$0xff]
    %v60 = vld [vmem:[%s48 + $0x58] sm:$0xff]
    %v61 = vld [vmem:[%s48 + $0x60] sm:$0xff]
    %v62 = vld [vmem:[%s48 + $0x68] sm:$0xff]
    %v63 = vld [vmem:[%s48 + $0x70] sm:$0xff]
    %v64 = vld [vmem:[%s48 + $0x78] sm:$0xff]
    %v65 = vld [vmem:[#allocation4] sm:$0xff]
    %66 = vmatprep.subr.mxu0 0.0
    %67 = vmatpush1.msra.mxu0 %v49
    %68 = vmatprep.subr.mxu0 0.0
    %69 = vmatpush1.msra.mxu0 %v50
    %70 = vmatprep.subr.mxu0 0.0
    %71 = vmatpush1.msra.mxu0 %v51
    %72 = vmatprep.subr.mxu0 0.0
    %73 = vmatpush1.msra.mxu0 %v52
    %74 = vmatprep.subr.mxu0 0.0
    %75 = vmatpush1.msra.mxu0 %v53
    %76 = vmatprep.subr.mxu0 0.0
    %77 = vmatpush1.msra.mxu0 %v54
    %78 = vmatprep.subr.mxu0 0.0
    %79 = vmatpush1.msra.mxu0 %v55
    %80 = vmatprep.subr.mxu0 0.0
    %81 = vmatpush1.msra.mxu0 %v56
    %82 = vmatprep.subr.mxu0 0.0
    %83 = vmatpush1.msra.mxu0 %v57
    %84 = vmatprep.subr.mxu0 0.0
    %85 = vmatpush1.msra.mxu0 %v58
    %86 = vmatprep.subr.mxu0 0.0
    %87 = vmatpush1.msra.mxu0 %v59
    %88 = vmatprep.subr.mxu0 0.0
    %89 = vmatpush1.msra.mxu0 %v60
    %90 = vmatprep.subr.mxu0 0.0
    %91 = vmatpush1.msra.mxu0 %v61
    %92 = vmatprep.subr.mxu0 0.0
    %93 = vmatpush1.msra.mxu0 %v62
    %94 = vmatprep.subr.mxu0 0.0
    %95 = vmatpush1.msra.mxu0 %v63
    %96 = vmatprep.subr.mxu0 0.0
    %97 = vmatpush1.msra.mxu0 %v64
    %98 = vmatprep.subr.mxu0 0.0
    %99 = vmatpush1.msra.mxu0 0.0
    %100 = vmatprep.subr.mxu0 0.0
    %101 = vmatpush1.msra.mxu0 0.0
    %102 = vmatprep.subr.mxu0 0.0
    %103 = vmatpush1.msra.mxu0 0.0
    %104 = vmatprep.subr.mxu0 0.0
    %105 = vmatpush1.msra.mxu0 0.0
    %106 = vmatprep.subr.mxu0 0.0
    %107 = vmatpush1.msra.mxu0 0.0
    %108 = vmatprep.subr.mxu0 0.0
    %109 = vmatpush1.msra.mxu0 0.0
    %110 = vmatprep.subr.mxu0 0.0
    %111 = vmatpush1.msra.mxu0 0.0
    %112 = vmatprep.subr.mxu0 0.0
    %113 = vmatpush1.msra.mxu0 0.0
    %114 = vmatprep.subr.mxu0 0.0
    %115 = vmatpush1.msra.mxu0 0.0
    %116 = vmatprep.subr.mxu0 0.0
    %117 = vmatpush1.msra.mxu0 0.0
    %118 = vmatprep.subr.mxu0 0.0
    %119 = vmatpush1.msra.mxu0 0.0
    %120 = vmatprep.subr.mxu0 0.0
    %121 = vmatpush1.msra.mxu0 0.0
    %122 = vmatprep.subr.mxu0 0.0
    %123 = vmatpush1.msra.mxu0 0.0
    %124 = vmatprep.subr.mxu0 0.0
    %125 = vmatpush1.msra.mxu0 0.0
    %126 = vmatprep.subr.mxu0 0.0
    %127 = vmatpush1.msra.mxu0 0.0
    %128 = vmatprep.subr.mxu0 0.0
    %129 = vmatpush1.msra.mxu0 0.0
    %130 = vmatprep.mubr.f32.mxu0 0.0
    %131 = vmatmul.mubr.f32.gmra.mrb[0].mxu0 %v65
    %v132 = vpop.f32.mrb[0].mxu0
    %v133 = vadd.f32 0.0, %v132
    %v134 = vpop.f32.mrb[0].mxu0
    %135 = vdwg.mxu0
    %v136 = vmul.f32 %v133, %v133
    %137 = vadd.xlane.f32.xlu0 %v136
    %v138 = vpop.xlane.xlu0 %137
    %v139 = vrsqrt.pop %v138
    %v140 = vmul.f32 %v133, %v139
    %141 = vst [vmem:[#allocation9] sm:$0xff] %v140
    %s142 = sadd.s32 %s45, 1
    %s143 = sld [smem:[#allocation3 + %s142]]
    %s144 = smul.u32 %s143, 128
    %s145 = scalar_lea.vmem [#allocation7], %s144
    %v146 = vld [vmem:[%s145] sm:$0xff]
    %v147 = vld [vmem:[%s145 + $0x8] sm:$0xff]
    %v148 = vld [vmem:[%s145 + $0x10] sm:$0xff]
    %v149 = vld [vmem:[%s145 + $0x18] sm:$0xff]
    %v150 = vld [vmem:[%s145 + $0x20] sm:$0xff]
    %v151 = vld [vmem:[%s145 + $0x28] sm:$0xff]
    %v152 = vld [vmem:[%s145 + $0x30] sm:$0xff]
    %v153 = vld [vmem:[%s145 + $0x38] sm:$0xff]
    %v154 = vld [vmem:[%s145 + $0x40] sm:$0xff]
    %v155 = vld [vmem:[%s145 + $0x48] sm:$0xff]
    %v156 = vld [vmem:[%s145 + $0x50] sm:$0xff]
    %v157 = vld [vmem:[%s145 + $0x58] sm:$0xff]
    %v158 = vld [vmem:[%s145 + $0x60] sm:$0xff]
    %v159 = vld [vmem:[%s145 + $0x68] sm:$0xff]
    %v160 = vld [vmem:[%s145 + $0x70] sm:$0xff]
    %v161 = vld [vmem:[%s145 + $0x78] sm:$0xff]
    %s162 = scalar_lea.vmem [#allocation4], 8
    %v163 = vld [vmem:[%s162] sm:$0xff]
    %164 = vmatprep.subr.mxu0 0.0
    %165 = vmatpush1.msra.mxu0 %v146
    %166 = vmatprep.subr.mxu0 0.0
    %167 = vmatpush1.msra.mxu0 %v147
    %168 = vmatprep.subr.mxu0 0.0
    %169 = vmatpush1.msra.mxu0 %v148
    %170 = vmatprep.subr.mxu0 0.0
    %171 = vmatpush1.msra.mxu0 %v149
    %172 = vmatprep.subr.mxu0 0.0
    %173 = vmatpush1.msra.mxu0 %v150
    %174 = vmatprep.subr.mxu0 0.0
    %175 = vmatpush1.msra.mxu0 %v151
    %176 = vmatprep.subr.mxu0 0.0
    %177 = vmatpush1.msra.mxu0 %v152
    %178 = vmatprep.subr.mxu0 0.0
    %179 = vmatpush1.msra.mxu0 %v153
    %180 = vmatprep.subr.mxu0 0.0
    %181 = vmatpush1.msra.mxu0 %v154
    %182 = vmatprep.subr.mxu0 0.0
    %183 = vmatpush1.msra.mxu0 %v155
    %184 = vmatprep.subr.mxu0 0.0
    %185 = vmatpush1.msra.mxu0 %v156
    %186 = vmatprep.subr.mxu0 0.0
    %187 = vmatpush1.msra.mxu0 %v157
    %188 = vmatprep.subr.mxu0 0.0
    %189 = vmatpush1.msra.mxu0 %v158
    %190 = vmatprep.subr.mxu0 0.0
    %191 = vmatpush1.msra.mxu0 %v159
    %192 = vmatprep.subr.mxu0 0.0
    %193 = vmatpush1.msra.mxu0 %v160
    %194 = vmatprep.subr.mxu0 0.0
    %195 = vmatpush1.msra.mxu0 %v161
    %196 = vmatprep.subr.mxu0 0.0
    %197 = vmatpush1.msra.mxu0 0.0
    %198 = vmatprep.subr.mxu0 0.0
    %199 = vmatpush1.msra.mxu0 0.0
    %200 = vmatprep.subr.mxu0 0.0
    %201 = vmatpush1.msra.mxu0 0.0
    %202 = vmatprep.subr.mxu0 0.0
    %203 = vmatpush1.msra.mxu0 0.0
    %204 = vmatprep.subr.mxu0 0.0
    %205 = vmatpush1.msra.mxu0 0.0
    %206 = vmatprep.subr.mxu0 0.0
    %207 = vmatpush1.msra.mxu0 0.0
    %208 = vmatprep.subr.mxu0 0.0
    %209 = vmatpush1.msra.mxu0 0.0
    %210 = vmatprep.subr.mxu0 0.0
    %211 = vmatpush1.msra.mxu0 0.0
    %212 = vmatprep.subr.mxu0 0.0
    %213 = vmatpush1.msra.mxu0 0.0
    %214 = vmatprep.subr.mxu0 0.0
    %215 = vmatpush1.msra.mxu0 0.0
    %216 = vmatprep.subr.mxu0 0.0
    %217 = vmatpush1.msra.mxu0 0.0
    %218 = vmatprep.subr.mxu0 0.0
    %219 = vmatpush1.msra.mxu0 0.0
    %220 = vmatprep.subr.mxu0 0.0
    %221 = vmatpush1.msra.mxu0 0.0
    %222 = vmatprep.subr.mxu0 0.0
    %223 = vmatpush1.msra.mxu0 0.0
    %224 = vmatprep.subr.mxu0 0.0
    %225 = vmatpush1.msra.mxu0 0.0
    %226 = vmatprep.subr.mxu0 0.0
    %227 = vmatpush1.msra.mxu0 0.0
    %228 = vmatprep.mubr.f32.mxu0 0.0
    %229 = vmatmul.mubr.f32.gmra.mrb[0].mxu0 %v163
    %v230 = vpop.f32.mrb[0].mxu0
    %v231 = vadd.f32 0.0, %v230
    %v232 = vpop.f32.mrb[0].mxu0
    %233 = vdwg.mxu0
    %v234 = vmul.f32 %v231, %v231
    %235 = vadd.xlane.f32.xlu0 %v234
    %v236 = vpop.xlane.xlu0 %235
    %v237 = vrsqrt.pop %v236
    %v238 = vmul.f32 %v231, %v237
    %s239 = scalar_lea.vmem [#allocation9], 8
    %240 = vst [vmem:[%s239] sm:$0xff] %v238
    // Predicated region
    $region18: #{tpu_custom_call.1} parent=1 // pred_check
      _
    $region19: #{tpu_custom_call.1} parent=1 // pred_check_branch
      %242 = sbr.rel (0) target = $region21
    $region20: #{tpu_custom_call.1} parent=1 // pred_region
      %s244 = ssub.s32 256, 256
      %245 = vsyncadd [#allocation6], %s244
      %s246 = sshll.u32 [#allocation9], 4
      %s247 = int_to_ptr.vmem [resolvable:$true] %s246
      %252 = dma.vmem_to_hbm [thread:$0]  %s247, 256, %s3, [#allocation6], 128, 128, 8
    $region21: #{tpu_custom_call.1} parent=1 // pred_fallthru
      _
    // Predicated region
    $region22: #{tpu_custom_call.1} parent=1 // pred_check
      _
    $region23: #{tpu_custom_call.1} parent=1 // pred_check_branch
      %254 = sbr.rel (0) target = $region25
    $region24: #{tpu_custom_call.1} parent=1 // pred_region
      %255 = dma.done [#allocation6], 256
    $region25: #{tpu_custom_call.1} parent=1 // pred_fallthru
      _
    %256 = vsyncpa [#allocation5], 1
    %257 = vsyncpa [#allocation8], 1
    %258 = vsyncpa [#allocation6], 1

</llo_original>
